<compile_context>
chip_gen: v7x
topology: tpu7x:2x2x1
jax: 0.10.0
libtpu: 0.0.40
codegen_flags: <defaults>
</compile_context>

<pallas_src>
import jax
import jax.numpy as jnp
from jax.experimental import pallas as pl
from jax.experimental.pallas import tpu as pltpu


IN_DIM, HID_DIM, OUT_DIM = 4, 16, 2


def actor_kernel(x_ref, w1_ref, b1_ref, w2_ref, b2_ref, w3_ref, b3_ref, o_ref):
    # x_ref : (TB, 4) f32    -- batch on the sublane axis (natural layout)
    # w*_ref: (in, out) bf16 -- pre-transposed Linear weights (MXU-native)
    # b*_ref: (1, out) f32
    x = x_ref[...].astype(jnp.bfloat16)

    # fc1 + ReLU  (MXU: (TB,4) @ (4,16), f32 accumulate)
    h1 = jnp.dot(x, w1_ref[...], preferred_element_type=jnp.float32)
    h1 = jnp.maximum(h1 + b1_ref[...], 0.0).astype(jnp.bfloat16)

    # fc2 + ReLU  (MXU: (TB,16) @ (16,16))
    h2 = jnp.dot(h1, w2_ref[...], preferred_element_type=jnp.float32)
    h2 = jnp.maximum(h2 + b2_ref[...], 0.0).astype(jnp.bfloat16)

    # fc3 + 100 * sigmoid  (MXU: (TB,16) @ (16,2)); the divide goes to the EUP.
    z = jnp.dot(h2, w3_ref[...], preferred_element_type=jnp.float32) + b3_ref[...]
    o_ref[...] = 100.0 * pl.reciprocal(1.0 + jnp.exp(-z), approx=True)
    # TODO(synk): on v6e/v7x the f32 epilogue could run in bf16 for a small
    # extra VPU win; kept f32 so v5e (no bf16 VALU) stays on a supported path.


def _round_up(v, m):
    return ((v + m - 1) // m) * m


def actor_forward(x, params, *, tb=2048):
    """x: (B, 4) float. Returns (B, 2) float32. PyTorch layout end-to-end."""
    w1, b1, w2, b2, w3, b3 = params
    B, in_dim = x.shape
    assert in_dim == IN_DIM

    # Tiny (<2 KiB) parameter prep: transpose to (in, out) + bf16 for the MXU.
    w1t = w1.T.astype(jnp.bfloat16)
    w2t = w2.T.astype(jnp.bfloat16)
    w3t = w3.T.astype(jnp.bfloat16)
    b1r = jnp.asarray(b1, jnp.float32).reshape(1, HID_DIM)
    b2r = jnp.asarray(b2, jnp.float32).reshape(1, HID_DIM)
    b3r = jnp.asarray(b3, jnp.float32).reshape(1, OUT_DIM)

    # Batch tile: always a sublane multiple (8); derived from B so that
    # mid/large batches produce >= 2 grid steps (both TensorCores on v7x),
    # capped at `tb` to bound VMEM / live-value pressure.
    tb_eff = _round_up(max(8, min(tb, _round_up(pl.cdiv(B, 2), 8))), 8)
    n_blocks = pl.cdiv(B, tb_eff)
    bp = n_blocks * tb_eff

    xp = x.astype(jnp.float32)
    if bp != B:  # only ragged batches pay a small pad copy; never a transpose.
        xp = jnp.pad(xp, ((0, bp - B), (0, 0)))

    resident = lambda shape: pl.BlockSpec(shape, lambda i: (0, 0))

    out = pl.pallas_call(
        actor_kernel,
        out_shape=jax.ShapeDtypeStruct((bp, OUT_DIM), jnp.float32),
        grid=(n_blocks,),
        in_specs=[
            pl.BlockSpec((tb_eff, IN_DIM), lambda i: (i, 0)),  # x tile, pipelined
            resident(w1t.shape), resident(b1r.shape),          # params stay
            resident(w2t.shape), resident(b2r.shape),          # resident in VMEM
            resident(w3t.shape), resident(b3r.shape),
        ],
        out_specs=pl.BlockSpec((tb_eff, OUT_DIM), lambda i: (i, 0)),
        compiler_params=pltpu.CompilerParams(
            dimension_semantics=("parallel",)),
    )(xp, w1t, b1r, w2t, b2r, w3t, b3r)

    return out if bp == B else out[:B]


def init_params(key):
    """nn.Linear-style init: W (out, in), b (out,), U(-1/sqrt(fan_in), +)."""
    dims = [(IN_DIM, HID_DIM), (HID_DIM, HID_DIM), (HID_DIM, OUT_DIM)]
    params = []
    for fan_in, fan_out in dims:
        kw, kb, key = jax.random.split(key, 3)
        bound = 1.0 / jnp.sqrt(fan_in)
        w = jax.random.uniform(kw, (fan_out, fan_in), jnp.float32, -bound, bound)
        b = jax.random.uniform(kb, (fan_out,), jnp.float32, -bound, bound)
        params.extend([w, b])
    return tuple(params)


def reference_forward(x, params):
    w1, b1, w2, b2, w3, b3 = params
    h = jnp.maximum(x @ w1.T + b1, 0.0)
    h = jnp.maximum(h @ w2.T + b2, 0.0)
    return 100.0 * jax.nn.sigmoid(h @ w3.T + b3)


if __name__ == "__main__":
    key = jax.random.PRNGKey(0)
    kx1, kx2, kx3, kp = jax.random.split(key, 4)
    params = init_params(kp)

    # bf16 MXU operands + approx reciprocal => compare with an output-scale
    # tolerance (outputs live in [0, 100]); structural bugs would be O(10+).
    TOL = dict(atol=1.0, rtol=2e-2)

    # Small batch (single grid step).
    B = 8
    x = jax.random.normal(kx1, (B, IN_DIM), dtype=jnp.float32)
    out = jax.block_until_ready(actor_forward(x, params))
    assert out.shape == (B, OUT_DIM)
    assert jnp.allclose(out, reference_forward(x, params), **TOL), "mismatch (B=8)"

    # Mid batch: two grid steps, no padding (exercises the "parallel" axis).
    B2 = 384
    x2 = jax.random.normal(kx2, (B2, IN_DIM), dtype=jnp.float32)
    out2 = jax.block_until_ready(actor_forward(x2, params))
    assert out2.shape == (B2, OUT_DIM)
    assert jnp.allclose(out2, reference_forward(x2, params), **TOL), "mismatch (B=384)"

    # Ragged batch: exercises the padded tail block + output slice path.
    B3 = 100
    x3 = jax.random.normal(kx3, (B3, IN_DIM), dtype=jnp.float32)
    out3 = jax.block_until_ready(actor_forward(x3, params))
    assert out3.shape == (B3, OUT_DIM)
    assert jnp.allclose(out3, reference_forward(x3, params), **TOL), "mismatch (B=100)"

    print("KERNEL_OK")
</pallas_src>

<mosaic_0001>
module attributes {stable_mosaic.version = 11 : i64} {
  func.func @actor_kernel(%arg0: i32, %arg1: memref<8x4xf32, #tpu.memory_space<vmem>>, %arg2: memref<4x16xbf16, #tpu.memory_space<vmem>>, %arg3: memref<1x16xf32, #tpu.memory_space<vmem>>, %arg4: memref<16x16xbf16, #tpu.memory_space<vmem>>, %arg5: memref<1x16xf32, #tpu.memory_space<vmem>>, %arg6: memref<16x2xbf16, #tpu.memory_space<vmem>>, %arg7: memref<1x2xf32, #tpu.memory_space<vmem>>, %arg8: memref<8x2xf32, #tpu.memory_space<vmem>>) attributes {dimension_semantics = [#tpu.dimension_semantics<parallel>], iteration_bounds = array<i64: 1>, scalar_prefetch = 0 : i64, scratch_operands = 0 : i64, tpu.core_type = #tpu.core_type<tc>, window_params = [{transform_indices = @transform_0, window_bounds = array<i64: 8, 4>}, {pipeline_mode = #tpu.pipeline_mode<synchronous>, transform_indices = @transform_1, window_bounds = array<i64: 4, 16>}, {pipeline_mode = #tpu.pipeline_mode<synchronous>, transform_indices = @transform_2, window_bounds = array<i64: 1, 16>}, {pipeline_mode = #tpu.pipeline_mode<synchronous>, transform_indices = @transform_3, window_bounds = array<i64: 16, 16>}, {pipeline_mode = #tpu.pipeline_mode<synchronous>, transform_indices = @transform_4, window_bounds = array<i64: 1, 16>}, {pipeline_mode = #tpu.pipeline_mode<synchronous>, transform_indices = @transform_5, window_bounds = array<i64: 16, 2>}, {pipeline_mode = #tpu.pipeline_mode<synchronous>, transform_indices = @transform_6, window_bounds = array<i64: 1, 2>}, {transform_indices = @transform_7, window_bounds = array<i64: 8, 2>}]} {
    %c0 = arith.constant 0 : index
    %c0_0 = arith.constant 0 : index
    %0 = vector.load %arg1[%c0, %c0_0] : memref<8x4xf32, #tpu.memory_space<vmem>>, vector<8x4xf32>
    %1 = arith.truncf %0 : vector<8x4xf32> to vector<8x4xbf16>
    %c0_1 = arith.constant 0 : index
    %c0_2 = arith.constant 0 : index
    %2 = vector.load %arg2[%c0_1, %c0_2] : memref<4x16xbf16, #tpu.memory_space<vmem>>, vector<4x16xbf16>
    %cst = arith.constant dense<0.000000e+00> : vector<8x16xf32>
    %3 = tpu.matmul %1, %2, %cst {dimension_numbers = #tpu.dot_dimension_numbers<[1], [0], [0], [1], [0, 0, 1, 1], [], []>} : vector<8x4xbf16>, vector<4x16xbf16>, vector<8x16xf32> -> vector<8x16xf32>
    %c0_3 = arith.constant 0 : index
    %c0_4 = arith.constant 0 : index
    %4 = vector.load %arg3[%c0_3, %c0_4] : memref<1x16xf32, #tpu.memory_space<vmem>>, vector<1x16xf32>
    %5 = vector.broadcast %4 : vector<1x16xf32> to vector<8x16xf32>
    %6 = arith.addf %3, %5 : vector<8x16xf32>
    %cst_5 = arith.constant 0.000000e+00 : f32
    %7 = vector.broadcast %cst_5 : f32 to vector<8x16xf32>
    %8 = arith.maximumf %6, %7 : vector<8x16xf32>
    %9 = arith.truncf %8 : vector<8x16xf32> to vector<8x16xbf16>
    %c0_6 = arith.constant 0 : index
    %c0_7 = arith.constant 0 : index
    %10 = vector.load %arg4[%c0_6, %c0_7] : memref<16x16xbf16, #tpu.memory_space<vmem>>, vector<16x16xbf16>
    %cst_8 = arith.constant dense<0.000000e+00> : vector<8x16xf32>
    %11 = tpu.matmul %9, %10, %cst_8 {dimension_numbers = #tpu.dot_dimension_numbers<[1], [0], [0], [1], [0, 0, 1, 1], [], []>} : vector<8x16xbf16>, vector<16x16xbf16>, vector<8x16xf32> -> vector<8x16xf32>
    %c0_9 = arith.constant 0 : index
    %c0_10 = arith.constant 0 : index
    %12 = vector.load %arg5[%c0_9, %c0_10] : memref<1x16xf32, #tpu.memory_space<vmem>>, vector<1x16xf32>
    %13 = vector.broadcast %12 : vector<1x16xf32> to vector<8x16xf32>
    %14 = arith.addf %11, %13 : vector<8x16xf32>
    %cst_11 = arith.constant 0.000000e+00 : f32
    %15 = vector.broadcast %cst_11 : f32 to vector<8x16xf32>
    %16 = arith.maximumf %14, %15 : vector<8x16xf32>
    %17 = arith.truncf %16 : vector<8x16xf32> to vector<8x16xbf16>
    %c0_12 = arith.constant 0 : index
    %c0_13 = arith.constant 0 : index
    %18 = vector.load %arg6[%c0_12, %c0_13] : memref<16x2xbf16, #tpu.memory_space<vmem>>, vector<16x2xbf16>
    %cst_14 = arith.constant dense<0.000000e+00> : vector<8x2xf32>
    %19 = tpu.matmul %17, %18, %cst_14 {dimension_numbers = #tpu.dot_dimension_numbers<[1], [0], [0], [1], [0, 0, 1, 1], [], []>} : vector<8x16xbf16>, vector<16x2xbf16>, vector<8x2xf32> -> vector<8x2xf32>
    %c0_15 = arith.constant 0 : index
    %c0_16 = arith.constant 0 : index
    %20 = vector.load %arg7[%c0_15, %c0_16] : memref<1x2xf32, #tpu.memory_space<vmem>>, vector<1x2xf32>
    %21 = vector.broadcast %20 : vector<1x2xf32> to vector<8x2xf32>
    %22 = arith.addf %19, %21 : vector<8x2xf32>
    %cst_17 = arith.constant 0.000000e+00 : f32
    %23 = vector.broadcast %cst_17 : f32 to vector<8x2xf32>
    %24 = arith.subf %23, %22 : vector<8x2xf32>
    %25 = math.exp %24 : vector<8x2xf32>
    %cst_18 = arith.constant 1.000000e+00 : f32
    %26 = vector.broadcast %cst_18 : f32 to vector<8x2xf32>
    %27 = arith.addf %26, %25 : vector<8x2xf32>
    %28 = tpu.reciprocal %27 {approx = true} : vector<8x2xf32> -> vector<8x2xf32>
    %cst_19 = arith.constant 1.000000e+02 : f32
    %29 = vector.broadcast %cst_19 : f32 to vector<8x2xf32>
    %30 = arith.mulf %29, %28 : vector<8x2xf32>
    %c0_20 = arith.constant 0 : index
    %c0_21 = arith.constant 0 : index
    %31 = vector.load %arg8[%c0_20, %c0_21] : memref<8x2xf32, #tpu.memory_space<vmem>>, vector<8x2xf32>
    tpu.vector_store %arg8[%c0_20, %c0_21], %30 {strides = array<i32>} : memref<8x2xf32, #tpu.memory_space<vmem>>, vector<8x2xf32>,
    return
  }
  func.func @transform_0(%arg0: i32) -> (i32, i32) {
    %c0_i32 = arith.constant 0 : i32
    %c0_i32_0 = arith.constant 0 : i32
    return %arg0, %c0_i32 : i32, i32
  }
  func.func @transform_1(%arg0: i32) -> (i32, i32) {
    %c0_i32 = arith.constant 0 : i32
    %c0_i32_0 = arith.constant 0 : i32
    %c0_i32_1 = arith.constant 0 : i32
    return %c0_i32, %c0_i32_0 : i32, i32
  }
  func.func @transform_2(%arg0: i32) -> (i32, i32) {
    %c0_i32 = arith.constant 0 : i32
    %c0_i32_0 = arith.constant 0 : i32
    %c0_i32_1 = arith.constant 0 : i32
    return %c0_i32, %c0_i32_0 : i32, i32
  }
  func.func @transform_3(%arg0: i32) -> (i32, i32) {
    %c0_i32 = arith.constant 0 : i32
    %c0_i32_0 = arith.constant 0 : i32
    %c0_i32_1 = arith.constant 0 : i32
    return %c0_i32, %c0_i32_0 : i32, i32
  }
  func.func @transform_4(%arg0: i32) -> (i32, i32) {
    %c0_i32 = arith.constant 0 : i32
    %c0_i32_0 = arith.constant 0 : i32
    %c0_i32_1 = arith.constant 0 : i32
    return %c0_i32, %c0_i32_0 : i32, i32
  }
  func.func @transform_5(%arg0: i32) -> (i32, i32) {
    %c0_i32 = arith.constant 0 : i32
    %c0_i32_0 = arith.constant 0 : i32
    %c0_i32_1 = arith.constant 0 : i32
    return %c0_i32, %c0_i32_0 : i32, i32
  }
  func.func @transform_6(%arg0: i32) -> (i32, i32) {
    %c0_i32 = arith.constant 0 : i32
    %c0_i32_0 = arith.constant 0 : i32
    %c0_i32_1 = arith.constant 0 : i32
    return %c0_i32, %c0_i32_0 : i32, i32
  }
  func.func @transform_7(%arg0: i32) -> (i32, i32) {
    %c0_i32 = arith.constant 0 : i32
    %c0_i32_0 = arith.constant 0 : i32
    return %arg0, %c0_i32 : i32, i32
  }
}

</mosaic_0001>

<llo_original>
// kernel: tpu_custom_call.1
$region0: #{tpu_custom_call.1}
  #allocation0 [shape = 'u32[]', space=smem, size = 0x4, offset = 0x4, fixed_abs, tag = 'smem constant byte address 0x4 - core index']
  #allocation1 [shape = 'u32[144,128]{1,0:T(1,128)}', space=vmem, size = 0x12000, scoped, tag = 'internal scratch']
  %s0 = inlined_call_operand.vmem [shape: f32[8,4], index: 0, kind: input, shape index: {}]
  %s1 = inlined_call_operand.vmem [shape: bf16[4,16], index: 1, kind: input, shape index: {}]
  %s2 = inlined_call_operand.vmem [shape: f32[1,16], index: 2, kind: input, shape index: {}]
  %s3 = inlined_call_operand.vmem [shape: bf16[16,16], index: 3, kind: input, shape index: {}]
  %s4 = inlined_call_operand.vmem [shape: f32[1,16], index: 4, kind: input, shape index: {}]
  %s5 = inlined_call_operand.vmem [shape: bf16[16,2], index: 5, kind: input, shape index: {}]
  %s6 = inlined_call_operand.vmem [shape: f32[1,2], index: 6, kind: input, shape index: {}]
  %s7 = inlined_call_operand.vmem [shape: f32[8,2], index: 7, kind: output, shape index: {}]
  %s8 = sld [smem:[#allocation0]]
  $region38: #{tpu_custom_call.1} parent=0
    _
  %s10 = ssub.s32 1, %s8
  %s11 = scalar_select 0, %s10, %s8
  // Predicated region
  $region2: #{tpu_custom_call.1} parent=0 // pred_check
    _
  $region3: #{tpu_custom_call.1} parent=0 // pred_check_branch
    %13 = sbr.rel (0) target = $region5
  $region4: #{tpu_custom_call.1} parent=0 // pred_region
    _
  $region5: #{tpu_custom_call.1} parent=0 // pred_fallthru
    _
  // Predicated region
  $region6: #{tpu_custom_call.1} parent=0 // pred_check
    _
  $region7: #{tpu_custom_call.1} parent=0 // pred_check_branch
    %15 = sbr.rel (0) target = $region9
  $region8: #{tpu_custom_call.1} parent=0 // pred_region
    _
  $region9: #{tpu_custom_call.1} parent=0 // pred_fallthru
    _
  // Predicated region
  $region10: #{tpu_custom_call.1} parent=0 // pred_check
    _
  $region11: #{tpu_custom_call.1} parent=0 // pred_check_branch
    %17 = sbr.rel (0) target = $region13
  $region12: #{tpu_custom_call.1} parent=0 // pred_region
    _
  $region13: #{tpu_custom_call.1} parent=0 // pred_fallthru
    _
  // Predicated region
  $region14: #{tpu_custom_call.1} parent=0 // pred_check
    _
  $region15: #{tpu_custom_call.1} parent=0 // pred_check_branch
    %19 = sbr.rel (0) target = $region17
  $region16: #{tpu_custom_call.1} parent=0 // pred_region
    _
  $region17: #{tpu_custom_call.1} parent=0 // pred_fallthru
    _
  // Predicated region
  $region18: #{tpu_custom_call.1} parent=0 // pred_check
    _
  $region19: #{tpu_custom_call.1} parent=0 // pred_check_branch
    %21 = sbr.rel (0) target = $region21
  $region20: #{tpu_custom_call.1} parent=0 // pred_region
    _
  $region21: #{tpu_custom_call.1} parent=0 // pred_fallthru
    _
  // Predicated region
  $region22: #{tpu_custom_call.1} parent=0 // pred_check
    _
  $region23: #{tpu_custom_call.1} parent=0 // pred_check_branch
    %23 = sbr.rel (0) target = $region25
  $region24: #{tpu_custom_call.1} parent=0 // pred_region
    _
  $region25: #{tpu_custom_call.1} parent=0 // pred_fallthru
    _
  // Predicated region
  $region26: #{tpu_custom_call.1} parent=0 // pred_check
    _
  $region27: #{tpu_custom_call.1} parent=0 // pred_check_branch
    %25 = sbr.rel (0) target = $region29
  $region28: #{tpu_custom_call.1} parent=0 // pred_region
    _
  $region29: #{tpu_custom_call.1} parent=0 // pred_fallthru
    _
  %v27 = vld [vmem:[%s0] sm:$0xff]
  %v28 = vpack.c.bf16 %v27, %v27
  %v29 = vld [vmem:[%s1] sm:$0x3]
  %v30 = vld [vmem:[%s2] sm:$0x1]
  %v32 = vlaneseq
  %v33 = vshrl.u32 %v32, 7
  %v34 = vsub.s32 0, %v33
  %v35 = vrot.slane %v30, %v34
  %vm37 = vcmask 31744
  %v39 = vsel %vm37, %v28, 0
  %vm41 = vcmask 1041408
  %v43 = vsel %vm41, %v29, 0
  %45 = vmatprep.subr.bf16.mxu0 0
  %46 = vmatpush1.bf16.msra.mxu0 %v43
  %47 = vmatprep.subr.bf16.mxu0 0
  %48 = vmatpush1.bf16.msra.mxu0 0
  %49 = vmatprep.subr.bf16.mxu0 0
  %50 = vmatpush1.bf16.msra.mxu0 0
  %51 = vmatprep.subr.bf16.mxu0 0
  %52 = vmatpush1.bf16.msra.mxu0 0
  %53 = vmatprep.subr.bf16.mxu0 0
  %54 = vmatpush1.bf16.msra.mxu0 0
  %55 = vmatprep.subr.bf16.mxu0 0
  %56 = vmatpush1.bf16.msra.mxu0 0
  %57 = vmatprep.subr.bf16.mxu0 0
  %58 = vmatpush1.bf16.msra.mxu0 0
  %59 = vmatprep.subr.bf16.mxu0 0
  %60 = vmatpush1.bf16.msra.mxu0 0
  %61 = vmatprep.subr.bf16.mxu0 0
  %62 = vmatpush1.bf16.msra.mxu0 0
  %63 = vmatprep.subr.bf16.mxu0 0
  %64 = vmatpush1.bf16.msra.mxu0 0
  %65 = vmatprep.subr.bf16.mxu0 0
  %66 = vmatpush1.bf16.msra.mxu0 0
  %67 = vmatprep.subr.bf16.mxu0 0
  %68 = vmatpush1.bf16.msra.mxu0 0
  %69 = vmatprep.subr.bf16.mxu0 0
  %70 = vmatpush1.bf16.msra.mxu0 0
  %71 = vmatprep.subr.bf16.mxu0 0
  %72 = vmatpush1.bf16.msra.mxu0 0
  %73 = vmatprep.subr.bf16.mxu0 0
  %74 = vmatpush1.bf16.msra.mxu0 0
  %75 = vmatprep.subr.bf16.mxu0 0
  %76 = vmatpush1.bf16.msra.mxu0 0
  %77 = vmatprep.mubr.bf16.mxu0 0
  %78 = vmatmul.mubr.bf16.gmra.mrb[0].mxu0 %v39
  %v79 = vpop.f32.mrb[0].mxu0
  %v80 = vadd.f32 %v35, %v79
  %v81 = vpop.f32.mrb[0].mxu0
  %v82 = vpop.f32.mrb[0].mxu0
  %v83 = vpop.f32.mrb[0].mxu0
  %84 = vdwg.mxu0
  %v85 = vmax.f32 %v80, 0.0
  %v86 = vpack.c.bf16 %v85, %v85
  %v87 = vld [vmem:[%s3] sm:$0xf]
  %v88 = vld [vmem:[%s3 + $0x4] sm:$0xf]
  %v89 = vld [vmem:[%s4] sm:$0x1]
  %v91 = vlaneseq
  %v92 = vshrl.u32 %v91, 7
  %v93 = vsub.s32 0, %v92
  %v94 = vrot.slane %v89, %v93
  %v98 = vunpack.c.l.b16 %v87
  %v99 = vunpack.c.l.b16 %v88
  %v100 = vpack.c.b16 %v99, %v98
  %vm102 = vcmask 130048
  %v104 = vsel %vm102, %v86, 0
  %106 = vmatprep.subr.bf16.mxu0 0
  %107 = vmatpush1.bf16.msra.mxu0 %v100
  %108 = vmatprep.subr.bf16.mxu0 0
  %109 = vmatpush1.bf16.msra.mxu0 0
  %110 = vmatprep.subr.bf16.mxu0 0
  %111 = vmatpush1.bf16.msra.mxu0 0
  %112 = vmatprep.subr.bf16.mxu0 0
  %113 = vmatpush1.bf16.msra.mxu0 0
  %114 = vmatprep.subr.bf16.mxu0 0
  %115 = vmatpush1.bf16.msra.mxu0 0
  %116 = vmatprep.subr.bf16.mxu0 0
  %117 = vmatpush1.bf16.msra.mxu0 0
  %118 = vmatprep.subr.bf16.mxu0 0
  %119 = vmatpush1.bf16.msra.mxu0 0
  %120 = vmatprep.subr.bf16.mxu0 0
  %121 = vmatpush1.bf16.msra.mxu0 0
  %122 = vmatprep.subr.bf16.mxu0 0
  %123 = vmatpush1.bf16.msra.mxu0 0
  %124 = vmatprep.subr.bf16.mxu0 0
  %125 = vmatpush1.bf16.msra.mxu0 0
  %126 = vmatprep.subr.bf16.mxu0 0
  %127 = vmatpush1.bf16.msra.mxu0 0
  %128 = vmatprep.subr.bf16.mxu0 0
  %129 = vmatpush1.bf16.msra.mxu0 0
  %130 = vmatprep.subr.bf16.mxu0 0
  %131 = vmatpush1.bf16.msra.mxu0 0
  %132 = vmatprep.subr.bf16.mxu0 0
  %133 = vmatpush1.bf16.msra.mxu0 0
  %134 = vmatprep.subr.bf16.mxu0 0
  %135 = vmatpush1.bf16.msra.mxu0 0
  %136 = vmatprep.subr.bf16.mxu0 0
  %137 = vmatpush1.bf16.msra.mxu0 0
  %138 = vmatprep.mubr.bf16.mxu0 0
  %139 = vmatmul.mubr.bf16.gmra.mrb[0].mxu0 %v104
  %v140 = vpop.f32.mrb[0].mxu0
  %v141 = vadd.f32 %v94, %v140
  %v142 = vpop.f32.mrb[0].mxu0
  %v143 = vpop.f32.mrb[0].mxu0
  %v144 = vpop.f32.mrb[0].mxu0
  %145 = vdwg.mxu0
  %v146 = vmax.f32 %v141, 0.0
  %v147 = vpack.c.bf16 %v146, %v146
  %v148 = vld [vmem:[%s5] sm:$0xf]
  %v149 = vld [vmem:[%s5 + $0x4] sm:$0xf]
  %v150 = vld [vmem:[%s6] sm:$0x1]
  %v152 = vlaneseq
  %v153 = vshrl.u32 %v152, 7
  %v154 = vsub.s32 0, %v153
  %v155 = vrot.slane %v150, %v154
  %v159 = vunpack.c.l.b16 %v148
  %v160 = vunpack.c.l.b16 %v149
  %v161 = vpack.c.b16 %v160, %v159
  %v164 = vsel %vm102, %v147, 0
  %166 = vmatprep.subr.bf16.mxu0 0
  %167 = vmatpush1.bf16.msra.mxu0 %v161
  %168 = vmatprep.subr.bf16.mxu0 0
  %169 = vmatpush1.bf16.msra.mxu0 0
  %170 = vmatprep.subr.bf16.mxu0 0
  %171 = vmatpush1.bf16.msra.mxu0 0
  %172 = vmatprep.subr.bf16.mxu0 0
  %173 = vmatpush1.bf16.msra.mxu0 0
  %174 = vmatprep.subr.bf16.mxu0 0
  %175 = vmatpush1.bf16.msra.mxu0 0
  %176 = vmatprep.subr.bf16.mxu0 0
  %177 = vmatpush1.bf16.msra.mxu0 0
  %178 = vmatprep.subr.bf16.mxu0 0
  %179 = vmatpush1.bf16.msra.mxu0 0
  %180 = vmatprep.subr.bf16.mxu0 0
  %181 = vmatpush1.bf16.msra.mxu0 0
  %182 = vmatprep.subr.bf16.mxu0 0
  %183 = vmatpush1.bf16.msra.mxu0 0
  %184 = vmatprep.subr.bf16.mxu0 0
  %185 = vmatpush1.bf16.msra.mxu0 0
  %186 = vmatprep.subr.bf16.mxu0 0
  %187 = vmatpush1.bf16.msra.mxu0 0
  %188 = vmatprep.subr.bf16.mxu0 0
  %189 = vmatpush1.bf16.msra.mxu0 0
  %190 = vmatprep.subr.bf16.mxu0 0
  %191 = vmatpush1.bf16.msra.mxu0 0
  %192 = vmatprep.subr.bf16.mxu0 0
  %193 = vmatpush1.bf16.msra.mxu0 0
  %194 = vmatprep.subr.bf16.mxu0 0
  %195 = vmatpush1.bf16.msra.mxu0 0
  %196 = vmatprep.subr.bf16.mxu0 0
  %197 = vmatpush1.bf16.msra.mxu0 0
  %198 = vmatprep.mubr.bf16.mxu0 0
  %199 = vmatmul.mubr.bf16.gmra.mrb[0].mxu0 %v164
  %v200 = vpop.f32.mrb[0].mxu0
  %v201 = vadd.f32 %v155, %v200
  %v202 = vpop.f32.mrb[0].mxu0
  %v203 = vpop.f32.mrb[0].mxu0
  %v204 = vpop.f32.mrb[0].mxu0
  %205 = vdwg.mxu0
  %v206 = vsub.f32 0.0, %v201
  %v207 = vmul.f32 %v206, 1.442695
  %v208 = vpow.pop %v207
  %v209 = vadd.f32 %v208, 1.0
  %v210 = vrcp.pop %v209
  %v211 = vmul.f32 %v210, 100.0
  %vm212 = vcmask 15360
  %213 = vst.msk [vmem:[%s7] sm:$0xff] %vm212, %v211
  // Predicated region
  $region30: #{tpu_custom_call.1} parent=0 // pred_check
    _
  $region31: #{tpu_custom_call.1} parent=0 // pred_check_branch
    %215 = sbr.rel (0) target = $region33
  $region32: #{tpu_custom_call.1} parent=0 // pred_region
    _
  $region33: #{tpu_custom_call.1} parent=0 // pred_fallthru
    _
  // Predicated region
  $region34: #{tpu_custom_call.1} parent=0 // pred_check
    _
  $region35: #{tpu_custom_call.1} parent=0 // pred_check_branch
    %217 = sbr.rel (0) target = $region37
  $region36: #{tpu_custom_call.1} parent=0 // pred_region
    _
  $region37: #{tpu_custom_call.1} parent=0 // pred_fallthru
    _

</llo_original>
